<compile_context>
chip_gen: v7x
topology: tpu7x:2x2x1
jax: 0.10.0
libtpu: 0.0.40
codegen_flags: <defaults>
</compile_context>

<pallas_src>
import jax
import jax.numpy as jnp
from jax.experimental import pallas as pl
from jax.experimental.pallas import tpu as pltpu

_MIB = 1024 * 1024


def _round_up(x, m):
    return ((x + m - 1) // m) * m


def _pick_batch_block(b, target, max_waste=0.25):
    """Batch block <= target; prefers exact divisors, allows modest padding."""
    target = max(1, min(b, target))
    div = 1
    for bb in range(target, 0, -1):
        if b % bb == 0:
            div = bb
            break
    for bb in range(target, div, -1):
        if ((-b) % bb) / float(b) <= max_waste:
            return bb
    return div


def _pick_tile(n, cap):
    """Tile <= cap for a (padded+masked) axis: MXU-friendly 256/128, else 8."""
    cap = max(8, int(cap))
    if n <= cap:
        return n                       # single full-extent block (no padding)
    for align in (256, 128, 8):
        if cap >= align:
            return (cap // align) * align
    return 8


def _vmem_budget():
    try:
        cap = int(getattr(pltpu.get_tpu_info(), "vmem_capacity_bytes", 64 * _MIB))
    except Exception:  # best-effort hardware query
        cap = 64 * _MIB
    # 128 MiB parts (v5e/v6e): large tiles track the HBM roofline.
    # 64 MiB parts (v7x per-TC): stay conservative so double buffers never spill.
    budget = 64 * _MIB if cap >= 128 * _MIB else 24 * _MIB
    limit = int(min(cap * 3 // 4, 96 * _MIB))
    return budget, limit


def _make_kernel(*, multi_k, packed, mask_tail, t_enc_valid, tk, bb,
                 mxu_dtype, out_dtype):
    def _cast(x):
        return x.astype(mxu_dtype) if mxu_dtype is not None else x

    def _store(out_ref, c):
        c = c.astype(out_dtype)
        if packed:
            # Lane-dense store: pack the bb batches along the lane axis so the
            # final vst / HBM writeback slab is a multiple of 128 lanes wide.
            out_ref[0] = jnp.concatenate([c[b] for b in range(bb)], axis=-1)
        else:
            out_ref[...] = c

    if not multi_k:
        # Single-tile fast path: whole T_enc in one block, plain softmax,
        # no online-softmax bookkeeping and no scratch.
        def kernel(enc_ref, dec_ref, out_ref):
            enc = _cast(enc_ref[...])
            dec = _cast(dec_ref[...])
            s = jnp.einsum("bdh,beh->bde", dec, enc,
                           preferred_element_type=jnp.float32)
            m = jnp.max(s, axis=-1, keepdims=True)
            p = jnp.exp(s - m)
            l = jnp.sum(p, axis=-1, keepdims=True)
            c = jnp.einsum("bde,beh->bdh", p.astype(enc.dtype), enc,
                           preferred_element_type=jnp.float32)
            _store(out_ref, c * pl.reciprocal(l, approx=False))

        return kernel

    def kernel(enc_ref, dec_ref, out_ref, m_scr, l_scr, acc_scr):
        k = pl.program_id(2)

        @pl.when(k == 0)
        def _():
            m_scr[...] = jnp.full_like(m_scr, -jnp.inf)
            l_scr[...] = jnp.zeros_like(l_scr)
            acc_scr[...] = jnp.zeros_like(acc_scr)

        enc = _cast(enc_ref[...])
        dec = _cast(dec_ref[...])

        # scores (bb, td, tk): T_enc lands on the lane axis -> lane-wise softmax.
        s = jnp.einsum("bdh,beh->bde", dec, enc,
                       preferred_element_type=jnp.float32)
        if mask_tail:
            # Padded T_enc columns (last tile only) are pushed to -inf.
            col = jax.lax.broadcasted_iota(jnp.int32, s.shape, 2)
            s = jnp.where(col < (t_enc_valid - k * tk), s, -jnp.inf)

        # Flash-style online softmax over the tiled T_enc axis.
        m_prev = m_scr[...]
        m_new = jnp.maximum(m_prev, jnp.max(s, axis=-1, keepdims=True))
        alpha = jnp.exp(m_prev - m_new)
        p = jnp.exp(s - m_new)
        l_scr[...] = alpha * l_scr[...] + jnp.sum(p, axis=-1, keepdims=True)
        acc_scr[...] = alpha * acc_scr[...] + jnp.einsum(
            "bde,beh->bdh", p.astype(enc.dtype), enc,
            preferred_element_type=jnp.float32)
        m_scr[...] = m_new

        @pl.when(k == pl.num_programs(2) - 1)
        def _():
            _store(out_ref, acc_scr[...] * pl.reciprocal(l_scr[...], approx=False))

    return kernel


def attention(enc_output, dec_output, *, max_batch_block=None, max_enc_block=None,
              max_dec_block=None, mxu_dtype="auto"):
    """enc_output: (B, T_enc, H), dec_output: (B, T_dec, H) -> (B, T_dec, H).

    mxu_dtype="auto" feeds the MXU in bfloat16 when inputs are float32 (f32
    accumulation is kept); pass None / jnp.float32 for full-precision feeds.
    """
    B, T_enc, H = enc_output.shape
    Bd, T_dec, Hd = dec_output.shape
    assert B == Bd and H == Hd

    out_dtype = enc_output.dtype
    itemsize = jnp.dtype(enc_output.dtype).itemsize
    if isinstance(mxu_dtype, str) and mxu_dtype == "auto":
        mxu = jnp.bfloat16 if enc_output.dtype == jnp.float32 else None
    elif mxu_dtype is None:
        mxu = None
    else:
        mxu = None if jnp.dtype(mxu_dtype) == enc_output.dtype else jnp.dtype(mxu_dtype)

    budget, vmem_limit = _vmem_budget()

    # Batch block: amortize the ~0.35us/step overhead and fill >=128 MXU rows.
    if max_batch_block is None:
        max_batch_block = max(8, pl.cdiv(128, max(1, T_dec)))
    bb = _pick_batch_block(B, max_batch_block)

    # T_dec block (second grid axis); only tiled when footprint/cap requires it.
    td = T_dec if max_dec_block is None else _pick_tile(T_dec, max_dec_block)

    def _fixed(bb_, td_):
        # dec + out blocks (double-buffered) + f32 accumulator + m/l + slack.
        return (4 * bb_ * td_ * H * itemsize + bb_ * td_ * H * 4
                + 2 * bb_ * td_ * 4 + 256 * 1024)

    def _cap_tk(bb_, td_):
        # enc tile (double-buffered) + in-flight f32 score/prob temporaries.
        per_tk = 2 * bb_ * H * itemsize + 2 * bb_ * td_ * 4
        return (budget - _fixed(bb_, td_)) // max(1, per_tk)

    # Shrink the T_dec block, then the batch block, until a healthy enc tile fits.
    while _cap_tk(bb, td) < 256 and td > 128:
        td = max(128, ((td // 2) // 8) * 8)
    while _cap_tk(bb, td) < 256 and bb > 1:
        bb = max(1, bb // 2)

    cap = max(8, min(int(_cap_tk(bb, td)), 4096))
    if max_enc_block is not None:
        cap = min(cap, max(8, int(max_enc_block)))
    tk = _pick_tile(T_enc, cap)

    single_k = tk >= T_enc
    if single_k:
        tk, t_enc_pad, mask_tail = T_enc, T_enc, False
    else:
        t_enc_pad = _round_up(T_enc, tk)
        mask_tail = t_enc_pad != T_enc

    t_dec_pad = T_dec if td == T_dec else _round_up(T_dec, td)
    b_pad = _round_up(B, bb)

    # v7x has 2 TensorCores: make sure the "parallel" grid has >=2 blocks when
    # each half still feeds the MXU with >=128 rows.
    if (b_pad // bb) * (t_dec_pad // td) == 1 and bb >= 2 and bb * td >= 256:
        bb = (bb + 1) // 2
        b_pad = _round_up(B, bb)

    # Lane-dense packed output only when it actually reaches a 128-lane multiple.
    packed = (H % 128 != 0) and ((bb * H) % 128 == 0)

    enc = enc_output
    dec = dec_output
    if b_pad != B or t_enc_pad != T_enc:
        enc = jnp.pad(enc, ((0, b_pad - B), (0, t_enc_pad - T_enc), (0, 0)))
    if b_pad != B or t_dec_pad != T_dec:
        dec = jnp.pad(dec, ((0, b_pad - B), (0, t_dec_pad - T_dec), (0, 0)))

    nb, nd, nk = b_pad // bb, t_dec_pad // td, t_enc_pad // tk

    if packed:
        out_shape = jax.ShapeDtypeStruct((nb, t_dec_pad, bb * H), out_dtype)
        out_block = (1, td, bb * H)
    else:
        out_shape = jax.ShapeDtypeStruct((b_pad, t_dec_pad, H), out_dtype)
        out_block = (bb, td, H)

    kernel = _make_kernel(multi_k=not single_k, packed=packed,
                          mask_tail=mask_tail, t_enc_valid=T_enc, tk=tk, bb=bb,
                          mxu_dtype=mxu, out_dtype=out_dtype)

    # TODO(synk): per-spec pipeline-depth tuning (pl.Buffered(1) on dec when v7x
    # VMEM is tight, pl.Buffered(3) on enc for DMA-exposed small-H shapes).
    if single_k:
        grid = (nb, nd)
        in_specs = [pl.BlockSpec((bb, tk, H), lambda i, j: (i, 0, 0)),   # enc
                    pl.BlockSpec((bb, td, H), lambda i, j: (i, j, 0))]   # dec
        out_specs = pl.BlockSpec(out_block, lambda i, j: (i, j, 0))
        scratch = []
        semantics = ("parallel", "parallel")
    else:
        grid = (nb, nd, nk)
        in_specs = [pl.BlockSpec((bb, tk, H), lambda i, j, k: (i, k, 0)),  # enc
                    pl.BlockSpec((bb, td, H), lambda i, j, k: (i, j, 0))]  # dec
        out_specs = pl.BlockSpec(out_block, lambda i, j, k: (i, j, 0))
        scratch = [pltpu.VMEM((bb, td, 1), jnp.float32),   # running max
                   pltpu.VMEM((bb, td, 1), jnp.float32),   # running denominator
                   pltpu.VMEM((bb, td, H), jnp.float32)]   # f32 accumulator
        semantics = ("parallel", "parallel", "arbitrary")

    out = pl.pallas_call(
        kernel,
        out_shape=out_shape,
        grid_spec=pltpu.PrefetchScalarGridSpec(
            num_scalar_prefetch=0,
            grid=grid,
            in_specs=in_specs,
            out_specs=out_specs,
            scratch_shapes=scratch),
        compiler_params=pltpu.CompilerParams(
            dimension_semantics=semantics,
            vmem_limit_bytes=vmem_limit),
    )(enc, dec)

    if packed:
        out = out.reshape(nb, t_dec_pad, bb, H).transpose(0, 2, 1, 3)
        out = out.reshape(b_pad, t_dec_pad, H)
    return out[:B, :T_dec]


def _attention_ref(enc_output, dec_output):
    # Pure-JAX reference mirroring the PyTorch module (high-precision matmuls).
    a_t = jnp.einsum("beh,bdh->bed", enc_output, dec_output,
                     precision=jax.lax.Precision.HIGHEST)   # (B, T_enc, T_dec)
    a_t = jax.nn.softmax(a_t, axis=1)
    c_t = jnp.einsum("bed,beh->bdh", a_t, enc_output,
                     precision=jax.lax.Precision.HIGHEST)   # (B, T_dec, H)
    return c_t


if __name__ == "__main__":
    key = jax.random.PRNGKey(0)

    def _check(B, T_enc, T_dec, H, tol, **kw):
        k1, k2 = jax.random.split(jax.random.fold_in(key, B * 1000 + T_enc))
        enc = jax.random.normal(k1, (B, T_enc, H), dtype=jnp.float32)
        dec = jax.random.normal(k2, (B, T_dec, H), dtype=jnp.float32)
        out = jax.block_until_ready(attention(enc, dec, **kw))
        ref = _attention_ref(enc, dec)
        assert out.shape == ref.shape
        assert jnp.allclose(out, ref, atol=tol, rtol=tol), (
            float(jnp.max(jnp.abs(out - ref))))

    # Tolerance accounts for bfloat16 MXU feeds (default mxu_dtype="auto");
    # the softmax/accumulation math itself is exact (f32, exact reciprocal).
    TOL = 5e-2

    # 1) Single-tile fast path: default bf16 feeds and explicit f32 feeds.
    _check(2, 16, 8, 32, TOL)
    _check(2, 16, 8, 32, TOL, mxu_dtype=None)
    # 2) Multi-tile (flash-style) T_enc reduction.
    _check(2, 16, 8, 32, TOL, max_enc_block=8)
    # 3) Padded batch + padded/masked T_enc tail + lane-dense packed output.
    _check(7, 40, 8, 32, TOL, max_batch_block=4, max_enc_block=16)
    # 4) Tiled / padded T_dec (second parallel grid axis).
    _check(2, 32, 24, 32, TOL, max_dec_block=16)

    print("KERNEL_OK")
</pallas_src>

<mosaic_0001>
module attributes {stable_mosaic.version = 11 : i64} {
  func.func @kernel(%arg0: i32, %arg1: i32, %arg2: memref<2x16x32xf32, #tpu.memory_space<vmem>>, %arg3: memref<2x8x32xf32, #tpu.memory_space<vmem>>, %arg4: memref<2x8x32xf32, #tpu.memory_space<vmem>>) attributes {dimension_semantics = [#tpu.dimension_semantics<parallel>, #tpu.dimension_semantics<parallel>], iteration_bounds = array<i64: 1, 1>, scalar_prefetch = 0 : i64, scratch_operands = 0 : i64, tpu.core_type = #tpu.core_type<tc>, window_params = [{transform_indices = @transform_0, window_bounds = array<i64: 2, 16, 32>}, {transform_indices = @transform_1, window_bounds = array<i64: 2, 8, 32>}, {transform_indices = @transform_2, window_bounds = array<i64: 2, 8, 32>}]} {
    %c0 = arith.constant 0 : index
    %c0_0 = arith.constant 0 : index
    %c0_1 = arith.constant 0 : index
    %0 = vector.load %arg2[%c0, %c0_0, %c0_1] : memref<2x16x32xf32, #tpu.memory_space<vmem>>, vector<2x16x32xf32>
    %1 = arith.truncf %0 : vector<2x16x32xf32> to vector<2x16x32xbf16>
    %c0_2 = arith.constant 0 : index
    %c0_3 = arith.constant 0 : index
    %c0_4 = arith.constant 0 : index
    %2 = vector.load %arg3[%c0_2, %c0_3, %c0_4] : memref<2x8x32xf32, #tpu.memory_space<vmem>>, vector<2x8x32xf32>
    %3 = arith.truncf %2 : vector<2x8x32xf32> to vector<2x8x32xbf16>
    "tpu.trace_start"() <{level = 10 : i32, message = "bdh,beh->bde"}> : () -> ()
    %cst = arith.constant dense<0.000000e+00> : vector<2x8x16xf32>
    %4 = tpu.matmul %3, %1, %cst {dimension_numbers = #tpu.dot_dimension_numbers<[2], [2], [1], [1], [0, 0, 0, 1, 1, 1], [0], [0]>} : vector<2x8x32xbf16>, vector<2x16x32xbf16>, vector<2x8x16xf32> -> vector<2x8x16xf32>
    "tpu.trace_stop"() : () -> ()
    %cst_5 = arith.constant dense<0xFF800000> : vector<2x8xf32>
    %5 = vector.multi_reduction <maximumf>, %4, %cst_5 [2] : vector<2x8x16xf32> to vector<2x8xf32>
    %6 = vector.shape_cast %5 : vector<2x8xf32> to vector<2x8x1xf32>
    %7 = vector.broadcast %6 : vector<2x8x1xf32> to vector<2x8x16xf32>
    %8 = arith.subf %4, %7 : vector<2x8x16xf32>
    %9 = math.exp %8 : vector<2x8x16xf32>
    %cst_6 = arith.constant dense<0.000000e+00> : vector<2x8xf32>
    %10 = vector.multi_reduction <add>, %9, %cst_6 [2] : vector<2x8x16xf32> to vector<2x8xf32>
    %11 = vector.shape_cast %10 : vector<2x8xf32> to vector<2x8x1xf32>
    %12 = arith.truncf %9 : vector<2x8x16xf32> to vector<2x8x16xbf16>
    "tpu.trace_start"() <{level = 10 : i32, message = "bde,beh->bdh"}> : () -> ()
    %cst_7 = arith.constant dense<0.000000e+00> : vector<2x8x32xf32>
    %13 = tpu.matmul %12, %1, %cst_7 {dimension_numbers = #tpu.dot_dimension_numbers<[2], [1], [1], [2], [0, 0, 0, 1, 1, 2], [0], [0]>} : vector<2x8x16xbf16>, vector<2x16x32xbf16>, vector<2x8x32xf32> -> vector<2x8x32xf32>
    "tpu.trace_stop"() : () -> ()
    %14 = tpu.reciprocal %11 : vector<2x8x1xf32> -> vector<2x8x1xf32>
    %15 = vector.broadcast %14 : vector<2x8x1xf32> to vector<2x8x32xf32>
    %16 = arith.mulf %13, %15 : vector<2x8x32xf32>
    %c0_8 = arith.constant 0 : index
    %c0_9 = arith.constant 0 : index
    %c0_10 = arith.constant 0 : index
    %17 = vector.load %arg4[%c0_8, %c0_9, %c0_10] : memref<2x8x32xf32, #tpu.memory_space<vmem>>, vector<2x8x32xf32>
    tpu.vector_store %arg4[%c0_8, %c0_9, %c0_10], %16 {strides = array<i32>} : memref<2x8x32xf32, #tpu.memory_space<vmem>>, vector<2x8x32xf32>,
    return
  }
  func.func @transform_0(%arg0: i32, %arg1: i32) -> (i32, i32, i32) {
    %c0_i32 = arith.constant 0 : i32
    %c0_i32_0 = arith.constant 0 : i32
    %c0_i32_1 = arith.constant 0 : i32
    return %arg0, %c0_i32, %c0_i32_0 : i32, i32, i32
  }
  func.func @transform_1(%arg0: i32, %arg1: i32) -> (i32, i32, i32) {
    %c0_i32 = arith.constant 0 : i32
    %c0_i32_0 = arith.constant 0 : i32
    return %arg0, %arg1, %c0_i32 : i32, i32, i32
  }
  func.func @transform_2(%arg0: i32, %arg1: i32) -> (i32, i32, i32) {
    %c0_i32 = arith.constant 0 : i32
    %c0_i32_0 = arith.constant 0 : i32
    return %arg0, %arg1, %c0_i32 : i32, i32, i32
  }
}

</mosaic_0001>

<llo_original>
// kernel: tpu_custom_call.1
$region0: #{tpu_custom_call.1}
  #allocation0 [shape = 'u32[]', space=smem, size = 0x4, offset = 0x4, fixed_abs, tag = 'smem constant byte address 0x4 - core index']
  #allocation1 [shape = 'u32[144,128]{1,0:T(1,128)}', space=vmem, size = 0x12000, scoped, tag = 'internal scratch']
  %s0 = inlined_call_operand.hbm [shape: f32[2,16,32], index: 0, kind: input, shape index: {}]
  %s1 = inlined_call_operand.hbm [shape: f32[2,8,32], index: 1, kind: input, shape index: {}]
  %s2 = inlined_call_operand.hbm [shape: f32[2,8,32], index: 2, kind: output, shape index: {}]
  %s3 = sld [smem:[#allocation0]]
  $region26: #{tpu_custom_call.1} parent=0
    _
  %s5 = ssub.s32 1, %s3
  %s6 = scalar_select 0, %s5, %s3
  $region1: #{tpu_custom_call.1} parent=0
    #allocation2 [shape = 'u8[16384]{0}', space=vmem, size = 0x4000, scoped, tag = 'input window, operand 0, single buffered']
    #allocation3 [shape = 's32[1]{0}', space=sflag, size = 0x4, scoped, tag = 'scoped memory for tpu_custom_call.1']
    #allocation4 [shape = 's32[1]{0}', space=sflag, size = 0x4, scoped, tag = 'scoped memory for tpu_custom_call.1']
    #allocation5 [shape = 'u8[8192]{0}', space=vmem, size = 0x2000, scoped, tag = 'input window, operand 1, single buffered']
    #allocation6 [shape = 's32[1]{0}', space=sflag, size = 0x4, scoped, tag = 'scoped memory for tpu_custom_call.1']
    #allocation7 [shape = 'u8[8192]{0}', space=vmem, size = 0x2000, scoped, tag = 'output window, operand 0, single buffered']
    %7 = vsyncpa [#allocation3], 0
    %8 = vsyncpa [#allocation6], 0
    %9 = vsyncpa [#allocation4], 0
    // Predicated region
    $region2: #{tpu_custom_call.1} parent=1 // pred_check
      _
    $region3: #{tpu_custom_call.1} parent=1 // pred_check_branch
      %11 = sbr.rel (0) target = $region5
    $region4: #{tpu_custom_call.1} parent=1 // pred_region
      %s13 = ssub.s32 512, 512
      %14 = vsyncadd [#allocation3], %s13
      %s15 = sshll.u32 [#allocation2], 4
      %s16 = int_to_ptr.vmem [resolvable:$true] %s15
      %21 = dma.hbm_to_vmem [thread:$0]  %s0, 512, %s16, [#allocation3], 128, 128, 8
    $region5: #{tpu_custom_call.1} parent=1 // pred_fallthru
      _
    // Predicated region
    $region6: #{tpu_custom_call.1} parent=1 // pred_check
      _
    $region7: #{tpu_custom_call.1} parent=1 // pred_check_branch
      %23 = sbr.rel (0) target = $region9
    $region8: #{tpu_custom_call.1} parent=1 // pred_region
      %s25 = ssub.s32 256, 256
      %26 = vsyncadd [#allocation6], %s25
      %s27 = sshll.u32 [#allocation5], 4
      %s28 = int_to_ptr.vmem [resolvable:$true] %s27
      %33 = dma.hbm_to_vmem [thread:$0]  %s1, 256, %s28, [#allocation6], 128, 128, 8
    $region9: #{tpu_custom_call.1} parent=1 // pred_fallthru
      _
    // Predicated region
    $region10: #{tpu_custom_call.1} parent=1 // pred_check
      _
    $region11: #{tpu_custom_call.1} parent=1 // pred_check_branch
      %35 = sbr.rel (0) target = $region13
    $region12: #{tpu_custom_call.1} parent=1 // pred_region
      %36 = dma.done [#allocation3], 512
    $region13: #{tpu_custom_call.1} parent=1 // pred_fallthru
      _
    // Predicated region
    $region14: #{tpu_custom_call.1} parent=1 // pred_check
      _
    $region15: #{tpu_custom_call.1} parent=1 // pred_check_branch
      %38 = sbr.rel (0) target = $region17
    $region16: #{tpu_custom_call.1} parent=1 // pred_region
      %39 = dma.done [#allocation6], 256
    $region17: #{tpu_custom_call.1} parent=1 // pred_fallthru
      _
    %v41 = vld [vmem:[#allocation2] sm:$0xff]
    %v42 = vld [vmem:[#allocation2 + $0x8] sm:$0xff]
    %v43 = vld [vmem:[#allocation2 + $0x10] sm:$0xff]
    %v44 = vld [vmem:[#allocation2 + $0x18] sm:$0xff]
    %v45 = vpack.c.bf16 %v42, %v41
    %v46 = vpack.c.bf16 %v44, %v43
    %v47 = vld [vmem:[#allocation5] sm:$0xff]
    %v48 = vld [vmem:[#allocation5 + $0x8] sm:$0xff]
    %v49 = vpack.c.bf16 %v47, %v47
    %v50 = vpack.c.bf16 %v48, %v48
    %vm51 = vcmask 261120
    %v53 = vsel %vm51, %v49, 0
    %v56 = vsel %vm51, %v45, 0
    %58 = vmatprep.subr.bf16.mxu0 0
    %59 = vmatpush1.bf16.xpose.msra.mxu0 %v56
    %60 = vmatprep.subr.bf16.mxu0 0
    %61 = vmatpush1.bf16.xpose.msra.mxu0 0
    %62 = vmatprep.subr.bf16.mxu0 0
    %63 = vmatpush1.bf16.xpose.msra.mxu0 0
    %64 = vmatprep.subr.bf16.mxu0 0
    %65 = vmatpush1.bf16.xpose.msra.mxu0 0
    %66 = vmatprep.subr.bf16.mxu0 0
    %67 = vmatpush1.bf16.xpose.msra.mxu0 0
    %68 = vmatprep.subr.bf16.mxu0 0
    %69 = vmatpush1.bf16.xpose.msra.mxu0 0
    %70 = vmatprep.subr.bf16.mxu0 0
    %71 = vmatpush1.bf16.xpose.msra.mxu0 0
    %72 = vmatprep.subr.bf16.mxu0 0
    %73 = vmatpush1.bf16.xpose.msra.mxu0 0
    %74 = vmatprep.subr.bf16.mxu0 0
    %75 = vmatpush1.bf16.xpose.msra.mxu0 0
    %76 = vmatprep.subr.bf16.mxu0 0
    %77 = vmatpush1.bf16.xpose.msra.mxu0 0
    %78 = vmatprep.subr.bf16.mxu0 0
    %79 = vmatpush1.bf16.xpose.msra.mxu0 0
    %80 = vmatprep.subr.bf16.mxu0 0
    %81 = vmatpush1.bf16.xpose.msra.mxu0 0
    %82 = vmatprep.subr.bf16.mxu0 0
    %83 = vmatpush1.bf16.xpose.msra.mxu0 0
    %84 = vmatprep.subr.bf16.mxu0 0
    %85 = vmatpush1.bf16.xpose.msra.mxu0 0
    %86 = vmatprep.subr.bf16.mxu0 0
    %87 = vmatpush1.bf16.xpose.msra.mxu0 0
    %88 = vmatprep.subr.bf16.mxu0 0
    %89 = vmatpush1.bf16.xpose.msra.mxu0 0
    %90 = vmatprep.mubr.bf16.mxu0 0
    %91 = vmatmul.mubr.bf16.gmra.mrb[0].mxu0 %v53
    %v92 = vpop.f32.mrb[0].mxu0
    %v93 = vadd.f32 0.0, %v92
    %v94 = vpop.f32.mrb[0].mxu0
    %v95 = vpop.f32.mrb[0].mxu0
    %v96 = vpop.f32.mrb[0].mxu0
    %97 = vdwg.mxu0
    %v99 = vsel %vm51, %v50, 0
    %v102 = vsel %vm51, %v46, 0
    %104 = vmatprep.subr.bf16.mxu0 0
    %105 = vmatpush1.bf16.xpose.msra.mxu0 %v102
    %106 = vmatprep.subr.bf16.mxu0 0
    %107 = vmatpush1.bf16.xpose.msra.mxu0 0
    %108 = vmatprep.subr.bf16.mxu0 0
    %109 = vmatpush1.bf16.xpose.msra.mxu0 0
    %110 = vmatprep.subr.bf16.mxu0 0
    %111 = vmatpush1.bf16.xpose.msra.mxu0 0
    %112 = vmatprep.subr.bf16.mxu0 0
    %113 = vmatpush1.bf16.xpose.msra.mxu0 0
    %114 = vmatprep.subr.bf16.mxu0 0
    %115 = vmatpush1.bf16.xpose.msra.mxu0 0
    %116 = vmatprep.subr.bf16.mxu0 0
    %117 = vmatpush1.bf16.xpose.msra.mxu0 0
    %118 = vmatprep.subr.bf16.mxu0 0
    %119 = vmatpush1.bf16.xpose.msra.mxu0 0
    %120 = vmatprep.subr.bf16.mxu0 0
    %121 = vmatpush1.bf16.xpose.msra.mxu0 0
    %122 = vmatprep.subr.bf16.mxu0 0
    %123 = vmatpush1.bf16.xpose.msra.mxu0 0
    %124 = vmatprep.subr.bf16.mxu0 0
    %125 = vmatpush1.bf16.xpose.msra.mxu0 0
    %126 = vmatprep.subr.bf16.mxu0 0
    %127 = vmatpush1.bf16.xpose.msra.mxu0 0
    %128 = vmatprep.subr.bf16.mxu0 0
    %129 = vmatpush1.bf16.xpose.msra.mxu0 0
    %130 = vmatprep.subr.bf16.mxu0 0
    %131 = vmatpush1.bf16.xpose.msra.mxu0 0
    %132 = vmatprep.subr.bf16.mxu0 0
    %133 = vmatpush1.bf16.xpose.msra.mxu0 0
    %134 = vmatprep.subr.bf16.mxu0 0
    %135 = vmatpush1.bf16.xpose.msra.mxu0 0
    %136 = vmatprep.mubr.bf16.mxu0 0
    %137 = vmatmul.mubr.bf16.gmra.mrb[0].mxu0 %v99
    %v138 = vpop.f32.mrb[0].mxu0
    %v139 = vadd.f32 0.0, %v138
    %v140 = vpop.f32.mrb[0].mxu0
    %v141 = vpop.f32.mrb[0].mxu0
    %v142 = vpop.f32.mrb[0].mxu0
    %143 = vdwg.mxu0
    %vm144 = vcmask 130048
    %v145 = vsel %vm144, %v93, -inf
    %146 = vmax.xlane.f32.xlu0 %v145
    %v147 = vpop.xlane.xlu0 %146
    %v148 = vsel %vm144, %v139, -inf
    %149 = vmax.xlane.f32.xlu0 %v148
    %v150 = vpop.xlane.xlu0 %149
    %v151 = vsub.f32 %v93, %v147
    %v152 = vsub.f32 %v139, %v150
    %v153 = vmul.f32 %v151, 1.442695
    %v154 = vpow.pop %v153
    %v155 = vmul.f32 %v152, 1.442695
    %v156 = vpow.pop %v155
    %v157 = vsel %vm144, %v154, 0.0
    %158 = vadd.xlane.f32.xlu0 %v157
    %v159 = vpop.xlane.xlu0 %158
    %v160 = vsel %vm144, %v156, 0.0
    %161 = vadd.xlane.f32.xlu0 %v160
    %v162 = vpop.xlane.xlu0 %161
    %v163 = vpack.c.bf16 %v154, %v154
    %v164 = vpack.c.bf16 %v156, %v156
    %v166 = vsel %vm144, %v163, 0
    %168 = vmatprep.subr.bf16.mxu0 0
    %169 = vmatpush1.bf16.msra.mxu0 %v45
    %170 = vmatprep.subr.bf16.mxu0 0
    %171 = vmatpush1.bf16.msra.mxu0 0
    %172 = vmatprep.subr.bf16.mxu0 0
    %173 = vmatpush1.bf16.msra.mxu0 0
    %174 = vmatprep.subr.bf16.mxu0 0
    %175 = vmatpush1.bf16.msra.mxu0 0
    %176 = vmatprep.subr.bf16.mxu0 0
    %177 = vmatpush1.bf16.msra.mxu0 0
    %178 = vmatprep.subr.bf16.mxu0 0
    %179 = vmatpush1.bf16.msra.mxu0 0
    %180 = vmatprep.subr.bf16.mxu0 0
    %181 = vmatpush1.bf16.msra.mxu0 0
    %182 = vmatprep.subr.bf16.mxu0 0
    %183 = vmatpush1.bf16.msra.mxu0 0
    %184 = vmatprep.subr.bf16.mxu0 0
    %185 = vmatpush1.bf16.msra.mxu0 0
    %186 = vmatprep.subr.bf16.mxu0 0
    %187 = vmatpush1.bf16.msra.mxu0 0
    %188 = vmatprep.subr.bf16.mxu0 0
    %189 = vmatpush1.bf16.msra.mxu0 0
    %190 = vmatprep.subr.bf16.mxu0 0
    %191 = vmatpush1.bf16.msra.mxu0 0
    %192 = vmatprep.subr.bf16.mxu0 0
    %193 = vmatpush1.bf16.msra.mxu0 0
    %194 = vmatprep.subr.bf16.mxu0 0
    %195 = vmatpush1.bf16.msra.mxu0 0
    %196 = vmatprep.subr.bf16.mxu0 0
    %197 = vmatpush1.bf16.msra.mxu0 0
    %198 = vmatprep.subr.bf16.mxu0 0
    %199 = vmatpush1.bf16.msra.mxu0 0
    %200 = vmatprep.mubr.bf16.mxu0 0
    %201 = vmatmul.mubr.bf16.gmra.mrb[0].mxu0 %v166
    %v202 = vpop.f32.mrb[0].mxu0
    %v203 = vadd.f32 0.0, %v202
    %v204 = vpop.f32.mrb[0].mxu0
    %v205 = vpop.f32.mrb[0].mxu0
    %v206 = vpop.f32.mrb[0].mxu0
    %207 = vdwg.mxu0
    %v209 = vsel %vm144, %v164, 0
    %211 = vmatprep.subr.bf16.mxu0 0
    %212 = vmatpush1.bf16.msra.mxu0 %v46
    %213 = vmatprep.subr.bf16.mxu0 0
    %214 = vmatpush1.bf16.msra.mxu0 0
    %215 = vmatprep.subr.bf16.mxu0 0
    %216 = vmatpush1.bf16.msra.mxu0 0
    %217 = vmatprep.subr.bf16.mxu0 0
    %218 = vmatpush1.bf16.msra.mxu0 0
    %219 = vmatprep.subr.bf16.mxu0 0
    %220 = vmatpush1.bf16.msra.mxu0 0
    %221 = vmatprep.subr.bf16.mxu0 0
    %222 = vmatpush1.bf16.msra.mxu0 0
    %223 = vmatprep.subr.bf16.mxu0 0
    %224 = vmatpush1.bf16.msra.mxu0 0
    %225 = vmatprep.subr.bf16.mxu0 0
    %226 = vmatpush1.bf16.msra.mxu0 0
    %227 = vmatprep.subr.bf16.mxu0 0
    %228 = vmatpush1.bf16.msra.mxu0 0
    %229 = vmatprep.subr.bf16.mxu0 0
    %230 = vmatpush1.bf16.msra.mxu0 0
    %231 = vmatprep.subr.bf16.mxu0 0
    %232 = vmatpush1.bf16.msra.mxu0 0
    %233 = vmatprep.subr.bf16.mxu0 0
    %234 = vmatpush1.bf16.msra.mxu0 0
    %235 = vmatprep.subr.bf16.mxu0 0
    %236 = vmatpush1.bf16.msra.mxu0 0
    %237 = vmatprep.subr.bf16.mxu0 0
    %238 = vmatpush1.bf16.msra.mxu0 0
    %239 = vmatprep.subr.bf16.mxu0 0
    %240 = vmatpush1.bf16.msra.mxu0 0
    %241 = vmatprep.subr.bf16.mxu0 0
    %242 = vmatpush1.bf16.msra.mxu0 0
    %243 = vmatprep.mubr.bf16.mxu0 0
    %244 = vmatmul.mubr.bf16.gmra.mrb[0].mxu0 %v209
    %v245 = vpop.f32.mrb[0].mxu0
    %v246 = vadd.f32 0.0, %v245
    %v247 = vpop.f32.mrb[0].mxu0
    %v248 = vpop.f32.mrb[0].mxu0
    %v249 = vpop.f32.mrb[0].mxu0
    %250 = vdwg.mxu0
    %v251 = vrcp.pop %v159
    %v252 = vrcp.pop %v162
    %v253 = vmul.f32 %v203, %v251
    %v254 = vmul.f32 %v246, %v252
    %255 = vst.msk [vmem:[#allocation7] sm:$0xff] %vm51, %v253
    %256 = vst.msk [vmem:[#allocation7 + $0x8] sm:$0xff] %vm51, %v254
    // Predicated region
    $region18: #{tpu_custom_call.1} parent=1 // pred_check
      _
    $region19: #{tpu_custom_call.1} parent=1 // pred_check_branch
      %258 = sbr.rel (0) target = $region21
    $region20: #{tpu_custom_call.1} parent=1 // pred_region
      %s260 = ssub.s32 256, 256
      %261 = vsyncadd [#allocation4], %s260
      %s262 = sshll.u32 [#allocation7], 4
      %s263 = int_to_ptr.vmem [resolvable:$true] %s262
      %268 = dma.vmem_to_hbm [thread:$0]  %s263, 256, %s2, [#allocation4], 128, 128, 8
    $region21: #{tpu_custom_call.1} parent=1 // pred_fallthru
      _
    // Predicated region
    $region22: #{tpu_custom_call.1} parent=1 // pred_check
      _
    $region23: #{tpu_custom_call.1} parent=1 // pred_check_branch
      %270 = sbr.rel (0) target = $region25
    $region24: #{tpu_custom_call.1} parent=1 // pred_region
      %271 = dma.done [#allocation4], 256
    $region25: #{tpu_custom_call.1} parent=1 // pred_fallthru
      _
    %272 = vsyncpa [#allocation3], 1
    %273 = vsyncpa [#allocation6], 1
    %274 = vsyncpa [#allocation4], 1

</llo_original>
